<compile_context>
chip_gen: v5e
topology: v5e:2x2
jax: 0.10.0
libtpu: 0.0.40
codegen_flags: <defaults>
</compile_context>

<pallas_src>
import jax
import jax.numpy as jnp
from jax.experimental import pallas as pl
from jax.experimental.pallas import tpu as pltpu

EPS = 1e-5  # PyTorch nn.LayerNorm default eps


def nsp_kernel(x_ref, mask_ref, prow_ref, w1_ref, scal_ref, out_ref):
    # x tile: (TN, S, E); mask tile: (TN, S); out tile: (TN, 128)
    xf = x_ref[...].astype(jnp.float32)
    mask = mask_ref[...]

    p = prow_ref[...]                      # (8, E) packed per-feature params
    wg = p[0:1, :]                         # norm1.gamma * compute_weight.weight (1, E)
    b1p = p[1:2, :]                        # norm2.beta @ W1 + linear1.bias      (1, E)
    w2 = p[2:3, :]                         # linear2 weight                      (1, E)
    c0 = scal_ref[0]                       # sum(norm1.beta * cw.weight) + cw.bias
    swg = scal_ref[1]                      # sum(wg)
    b2 = scal_ref[2]                       # linear2 bias

    inv_e = jnp.float32(1.0 / xf.shape[-1])

    # ---- norm1 + compute_weight fused into three lane reductions ----
    sx = jnp.sum(xf, axis=-1)                                # (TN, S)
    sxx = jnp.sum(xf * xf, axis=-1)                          # (TN, S)
    sxw = jnp.sum(xf * wg[None], axis=-1)                    # (TN, S)
    mu1 = sx * inv_e
    var1 = sxx * inv_e - mu1 * mu1
    aw = (sxw - mu1 * swg) * jax.lax.rsqrt(var1 + EPS) + c0

    # ---- masked_fill(mask_pad == 0, -1e9) ----
    aw = jnp.where(mask == 0.0, jnp.float32(-1e9), aw)

    # ---- softmax over the sequence axis (lane axis in this 2-D layout) ----
    m = jnp.max(aw, axis=-1, keepdims=True)
    ex = jnp.exp(aw - m)
    denom = jnp.sum(ex, axis=-1, keepdims=True)
    attn = ex * pl.reciprocal(denom, approx=True)            # (TN, S)

    # ---- attention pooling: sum_s attn[n,s] * x[n,s,:] -> (TN, E) ----
    pooled = jnp.sum(attn[:, :, None] * xf, axis=1)

    # ---- norm2 (gamma/beta folded into w1/b1 on the host) ----
    mu2 = jnp.mean(pooled, axis=-1, keepdims=True)
    var2 = jnp.mean(jnp.square(pooled - mu2), axis=-1, keepdims=True)
    z = (pooled - mu2) * jax.lax.rsqrt(var2 + EPS)

    # ---- linear1 (with folded norm2 affine) + ReLU ----
    h = jnp.dot(z, w1_ref[...], preferred_element_type=jnp.float32) + b1p
    h = jnp.maximum(h, 0.0)                                  # (TN, E)

    # ---- linear2 (regression head, E -> 1) ----
    out_col = jnp.sum(h * w2, axis=-1, keepdims=True) + b2   # (TN, 1)
    # Broadcast across 128 lanes so the store is an unmasked full-lane vst.
    out_ref[...] = jnp.broadcast_to(out_col, out_ref.shape)
    # TODO(synk): non-regression branch (Linear(E, 2) + LogSoftmax) not
    # emitted; the module defaults to regression=True.


def _round_up(v, m):
    return ((v + m - 1) // m) * m


def _pick_batch_tile(n, s, e, itemsize, x_tile_budget_bytes=2 << 20):
    """Largest sublane-aligned batch tile whose x slab stays under budget."""
    row_bytes = max(s * e * itemsize, 1)
    tn = (x_tile_budget_bytes // row_bytes) // 8 * 8
    tn = int(max(8, min(1024, tn)))
    if n <= tn:
        return _round_up(max(n, 1), 8)     # single tile covers the whole batch
    return tn


def nsp_forward(x, mask_pad, params):
    n, s, e = x.shape
    mask2d = (mask_pad.reshape(n, s) if mask_pad.ndim == 3 else mask_pad)
    mask2d = mask2d.astype(jnp.float32)

    tn = _pick_batch_tile(n, s, e, x.dtype.itemsize)
    n_pad = _round_up(n, tn)
    grid = n_pad // tn
    if n_pad != n:
        x = jnp.pad(x, ((0, n_pad - n), (0, 0), (0, 0)))
        mask2d = jnp.pad(mask2d, ((0, n_pad - n), (0, 0)))

    # ---- host-side parameter folding ----
    g1 = params["g1"].astype(jnp.float32)          # norm1 weight (1, E)
    be1 = params["be1"].astype(jnp.float32)        # norm1 bias   (1, E)
    wcw = params["wcw"].astype(jnp.float32)        # compute_weight.weight (1, E)
    g2 = params["g2"].astype(jnp.float32)          # norm2 weight (1, E)
    be2 = params["be2"].astype(jnp.float32)        # norm2 bias   (1, E)
    w1 = params["w1"].astype(jnp.float32)          # linear1 weight (E, E), (in, out)
    b1 = params["b1"].astype(jnp.float32)          # linear1 bias (1, E)
    w2 = params["w2"].astype(jnp.float32)          # linear2 weight (1, E)

    wg = g1 * wcw                                  # fused norm1-gamma * cw-weight
    w1p = g2.reshape(e, 1) * w1                    # fold norm2 gamma into W1
    b1p = be2 @ w1 + b1                            # fold norm2 beta into bias

    # Pack the three (1, E) parameter rows into one resident (8, E) slab.
    prow = jnp.concatenate(
        [wg, b1p, w2, jnp.zeros((5, e), jnp.float32)], axis=0)
    scal = jnp.stack([
        jnp.sum(be1 * wcw) + params["bcw"].astype(jnp.float32)[0, 0],  # c0
        jnp.sum(wg),                                                   # swg
        params["b2"].astype(jnp.float32)[0, 0],                        # b2
    ]).astype(jnp.float32)

    # Explicit scoped-VMEM request: safe on v5e/v6e (128 MiB) and v7x (64 MiB).
    vmem_limit = 32 << 20

    out = pl.pallas_call(
        nsp_kernel,
        out_shape=jax.ShapeDtypeStruct((n_pad, 128), jnp.float32),
        grid_spec=pltpu.PrefetchScalarGridSpec(
            num_scalar_prefetch=0,
            grid=(grid,),
            in_specs=[
                pl.BlockSpec((tn, s, e), lambda i: (i, 0, 0)),       # x tile
                pl.BlockSpec((tn, s), lambda i: (i, 0)),             # mask tile
                pl.BlockSpec((8, e), lambda i: (0, 0)),              # packed params
                pl.BlockSpec((e, e), lambda i: (0, 0)),              # folded linear1 weight
                pl.BlockSpec(memory_space=pltpu.MemorySpace.SMEM),   # scalar params
            ],
            out_specs=pl.BlockSpec((tn, 128), lambda i: (i, 0)),
        ),
        compiler_params=pltpu.CompilerParams(
            dimension_semantics=("parallel",),
            vmem_limit_bytes=vmem_limit),
    )(x, mask2d, prow, w1p, scal)
    return out[:n, 0]                                   # (N,)


def nsp_reference(x, mask_pad, p):
    """Pure-JAX reference mirroring the PyTorch forward (un-fused)."""
    def ln(v, g, b):
        mu = v.mean(-1, keepdims=True)
        var = ((v - mu) ** 2).mean(-1, keepdims=True)
        return (v - mu) / jnp.sqrt(var + EPS) * g + b

    xn = ln(x, p["g1"][0], p["be1"][0])
    aw = jnp.sum(xn * p["wcw"][0][None, None, :], axis=-1, keepdims=True) + p["bcw"][0, 0]
    aw = jnp.where(mask_pad == 0.0, -1e9, aw)
    attn = jax.nn.softmax(aw, axis=1)
    pooled = jnp.squeeze(jnp.swapaxes(attn, 1, 2) @ x, axis=1)
    pn = ln(pooled, p["g2"][0], p["be2"][0])
    h = jax.nn.relu(pn @ p["w1"] + p["b1"][0])
    return jnp.sum(h * p["w2"][0][None, :], axis=-1) + p["b2"][0, 0]


if __name__ == "__main__":
    N, S, E = 2, 8, 32
    key = jax.random.PRNGKey(0)
    ks = jax.random.split(key, 8)

    x = jax.random.normal(ks[0], (N, S, E), dtype=jnp.float32)
    # pad the last two positions of batch element 1
    mask_pad = jnp.ones((N, S, 1), jnp.float32).at[1, S - 2:, 0].set(0.0)

    params = dict(
        g1=jnp.ones((1, E), jnp.float32),                               # norm1 weight
        be1=jnp.zeros((1, E), jnp.float32),                             # norm1 bias
        wcw=jax.random.normal(ks[1], (1, E), jnp.float32) * 0.1,        # compute_weight.weight
        bcw=jax.random.normal(ks[2], (1, 1), jnp.float32) * 0.1,        # compute_weight.bias
        g2=jnp.ones((1, E), jnp.float32),                               # norm2 weight
        be2=jnp.zeros((1, E), jnp.float32),                             # norm2 bias
        w1=jax.random.normal(ks[3], (E, E), jnp.float32) * 0.1,         # linear1 weight (in, out)
        b1=jax.random.normal(ks[4], (1, E), jnp.float32) * 0.1,         # linear1 bias
        w2=jax.random.normal(ks[5], (1, E), jnp.float32) * 0.1,         # linear2 weight (1, E)
        b2=jax.random.normal(ks[6], (1, 1), jnp.float32) * 0.1,         # linear2 bias
    )

    out = jax.block_until_ready(nsp_forward(x, mask_pad, params))
    ref = nsp_reference(x, mask_pad, params)
    assert out.shape == (N,), out.shape
    assert jnp.allclose(out, ref, atol=5e-4, rtol=5e-4), (out, ref)
    print("KERNEL_OK")
</pallas_src>

<mosaic_0001>
module attributes {stable_mosaic.version = 11 : i64} {
  func.func @nsp_kernel(%arg0: i32, %arg1: memref<8x8x32xf32, #tpu.memory_space<vmem>>, %arg2: memref<8x8xf32, #tpu.memory_space<vmem>>, %arg3: memref<8x32xf32, #tpu.memory_space<vmem>>, %arg4: memref<32x32xf32, #tpu.memory_space<vmem>>, %arg5: memref<3xf32, #tpu.memory_space<smem>>, %arg6: memref<8x128xf32, #tpu.memory_space<vmem>>) attributes {dimension_semantics = [#tpu.dimension_semantics<parallel>], iteration_bounds = array<i64: 1>, scalar_prefetch = 0 : i64, scratch_operands = 0 : i64, tpu.core_type = #tpu.core_type<tc>, window_params = [{transform_indices = @transform_0, window_bounds = array<i64: 8, 8, 32>}, {transform_indices = @transform_1, window_bounds = array<i64: 8, 8>}, {pipeline_mode = #tpu.pipeline_mode<synchronous>, transform_indices = @transform_2, window_bounds = array<i64: 8, 32>}, {pipeline_mode = #tpu.pipeline_mode<synchronous>, transform_indices = @transform_3, window_bounds = array<i64: 32, 32>}, {transform_indices = @transform_4, window_bounds = array<i64: 3>}, {transform_indices = @transform_5, window_bounds = array<i64: 8, 128>}]} {
    %c0 = arith.constant 0 : index
    %c0_0 = arith.constant 0 : index
    %c0_1 = arith.constant 0 : index
    %0 = vector.load %arg1[%c0, %c0_0, %c0_1] : memref<8x8x32xf32, #tpu.memory_space<vmem>>, vector<8x8x32xf32>
    %c0_2 = arith.constant 0 : index
    %c0_3 = arith.constant 0 : index
    %1 = vector.load %arg2[%c0_2, %c0_3] : memref<8x8xf32, #tpu.memory_space<vmem>>, vector<8x8xf32>
    %c0_4 = arith.constant 0 : index
    %c0_5 = arith.constant 0 : index
    %2 = vector.load %arg3[%c0_4, %c0_5] : memref<8x32xf32, #tpu.memory_space<vmem>>, vector<8x32xf32>
    %3 = vector.extract_strided_slice %2 {offsets = [0, 0], sizes = [1, 32], strides = [1, 1]} : vector<8x32xf32> to vector<1x32xf32>
    %4 = vector.extract_strided_slice %2 {offsets = [1, 0], sizes = [1, 32], strides = [1, 1]} : vector<8x32xf32> to vector<1x32xf32>
    %5 = vector.extract_strided_slice %2 {offsets = [2, 0], sizes = [1, 32], strides = [1, 1]} : vector<8x32xf32> to vector<1x32xf32>
    %c0_6 = arith.constant 0 : index
    %6 = memref.load %arg5[%c0_6] : memref<3xf32, #tpu.memory_space<smem>>
    %c1 = arith.constant 1 : index
    %7 = memref.load %arg5[%c1] : memref<3xf32, #tpu.memory_space<smem>>
    %c2 = arith.constant 2 : index
    %8 = memref.load %arg5[%c2] : memref<3xf32, #tpu.memory_space<smem>>
    %cst = arith.constant dense<0.000000e+00> : vector<8x8xf32>
    %9 = vector.multi_reduction <add>, %0, %cst [2] : vector<8x8x32xf32> to vector<8x8xf32>
    %10 = arith.mulf %0, %0 : vector<8x8x32xf32>
    %cst_7 = arith.constant dense<0.000000e+00> : vector<8x8xf32>
    %11 = vector.multi_reduction <add>, %10, %cst_7 [2] : vector<8x8x32xf32> to vector<8x8xf32>
    %12 = vector.shape_cast %3 : vector<1x32xf32> to vector<1x1x32xf32>
    %13 = vector.broadcast %12 : vector<1x1x32xf32> to vector<8x8x32xf32>
    %14 = arith.mulf %0, %13 : vector<8x8x32xf32>
    %cst_8 = arith.constant dense<0.000000e+00> : vector<8x8xf32>
    %15 = vector.multi_reduction <add>, %14, %cst_8 [2] : vector<8x8x32xf32> to vector<8x8xf32>
    %cst_9 = arith.constant 3.125000e-02 : f32
    %16 = vector.broadcast %cst_9 : f32 to vector<8x8xf32>
    %17 = arith.mulf %9, %16 : vector<8x8xf32>
    %cst_10 = arith.constant 3.125000e-02 : f32
    %18 = vector.broadcast %cst_10 : f32 to vector<8x8xf32>
    %19 = arith.mulf %11, %18 : vector<8x8xf32>
    %20 = arith.mulf %17, %17 : vector<8x8xf32>
    %21 = arith.subf %19, %20 : vector<8x8xf32>
    %22 = vector.broadcast %7 : f32 to vector<8x8xf32>
    %23 = arith.mulf %17, %22 : vector<8x8xf32>
    %24 = arith.subf %15, %23 : vector<8x8xf32>
    %cst_11 = arith.constant 9.99999974E-6 : f32
    %25 = vector.broadcast %cst_11 : f32 to vector<8x8xf32>
    %26 = arith.addf %21, %25 : vector<8x8xf32>
    %27 = math.rsqrt %26 : vector<8x8xf32>
    %28 = arith.mulf %24, %27 : vector<8x8xf32>
    %29 = vector.broadcast %6 : f32 to vector<8x8xf32>
    %30 = arith.addf %28, %29 : vector<8x8xf32>
    %cst_12 = arith.constant 0.000000e+00 : f32
    %31 = vector.broadcast %cst_12 : f32 to vector<8x8xf32>
    %32 = arith.cmpf oeq, %1, %31 : vector<8x8xf32>
    %cst_13 = arith.constant -1.000000e+09 : f32
    %33 = vector.broadcast %cst_13 : f32 to vector<8x8xf32>
    %34 = arith.select %32, %33, %30 : vector<8x8xi1>, vector<8x8xf32>
    %cst_14 = arith.constant dense<0xFF800000> : vector<8xf32>
    %35 = vector.multi_reduction <maximumf>, %34, %cst_14 [1] : vector<8x8xf32> to vector<8xf32>
    %36 = vector.shape_cast %35 : vector<8xf32> to vector<8x1xf32>
    %37 = vector.broadcast %36 : vector<8x1xf32> to vector<8x8xf32>
    %38 = arith.subf %34, %37 : vector<8x8xf32>
    %39 = math.exp %38 : vector<8x8xf32>
    %cst_15 = arith.constant dense<0.000000e+00> : vector<8xf32>
    %40 = vector.multi_reduction <add>, %39, %cst_15 [1] : vector<8x8xf32> to vector<8xf32>
    %41 = vector.shape_cast %40 : vector<8xf32> to vector<8x1xf32>
    %42 = tpu.reciprocal %41 {approx = true} : vector<8x1xf32> -> vector<8x1xf32>
    %43 = vector.broadcast %42 : vector<8x1xf32> to vector<8x8xf32>
    %44 = arith.mulf %39, %43 : vector<8x8xf32>
    %45 = vector.shape_cast %44 : vector<8x8xf32> to vector<8x8x1xf32>
    %46 = vector.broadcast %45 : vector<8x8x1xf32> to vector<8x8x32xf32>
    %47 = arith.mulf %46, %0 : vector<8x8x32xf32>
    %cst_16 = arith.constant dense<0.000000e+00> : vector<8x32xf32>
    %48 = vector.multi_reduction <add>, %47, %cst_16 [1] : vector<8x8x32xf32> to vector<8x32xf32>
    %cst_17 = arith.constant dense<0.000000e+00> : vector<8xf32>
    %49 = vector.multi_reduction <add>, %48, %cst_17 [1] : vector<8x32xf32> to vector<8xf32>
    %50 = vector.shape_cast %49 : vector<8xf32> to vector<8x1xf32>
    %cst_18 = arith.constant 3.200000e+01 : f32
    %51 = vector.broadcast %cst_18 : f32 to vector<8x1xf32>
    %52 = arith.divf %50, %51 : vector<8x1xf32>
    %53 = vector.broadcast %52 : vector<8x1xf32> to vector<8x32xf32>
    %54 = arith.subf %48, %53 : vector<8x32xf32>
    %55 = arith.mulf %54, %54 : vector<8x32xf32>
    %cst_19 = arith.constant dense<0.000000e+00> : vector<8xf32>
    %56 = vector.multi_reduction <add>, %55, %cst_19 [1] : vector<8x32xf32> to vector<8xf32>
    %57 = vector.shape_cast %56 : vector<8xf32> to vector<8x1xf32>
    %cst_20 = arith.constant 3.200000e+01 : f32
    %58 = vector.broadcast %cst_20 : f32 to vector<8x1xf32>
    %59 = arith.divf %57, %58 : vector<8x1xf32>
    %60 = vector.broadcast %52 : vector<8x1xf32> to vector<8x32xf32>
    %61 = arith.subf %48, %60 : vector<8x32xf32>
    %cst_21 = arith.constant 9.99999974E-6 : f32
    %62 = vector.broadcast %cst_21 : f32 to vector<8x1xf32>
    %63 = arith.addf %59, %62 : vector<8x1xf32>
    %64 = math.rsqrt %63 : vector<8x1xf32>
    %65 = vector.broadcast %64 : vector<8x1xf32> to vector<8x32xf32>
    %66 = arith.mulf %61, %65 : vector<8x32xf32>
    %c0_22 = arith.constant 0 : index
    %c0_23 = arith.constant 0 : index
    %67 = vector.load %arg4[%c0_22, %c0_23] : memref<32x32xf32, #tpu.memory_space<vmem>>, vector<32x32xf32>
    %cst_24 = arith.constant dense<0.000000e+00> : vector<8x32xf32>
    %68 = tpu.matmul %66, %67, %cst_24 {dimension_numbers = #tpu.dot_dimension_numbers<[1], [0], [0], [1], [0, 0, 1, 1], [], []>} : vector<8x32xf32>, vector<32x32xf32>, vector<8x32xf32> -> vector<8x32xf32>
    %69 = vector.broadcast %4 : vector<1x32xf32> to vector<8x32xf32>
    %70 = arith.addf %68, %69 : vector<8x32xf32>
    %cst_25 = arith.constant 0.000000e+00 : f32
    %71 = vector.broadcast %cst_25 : f32 to vector<8x32xf32>
    %72 = arith.maximumf %70, %71 : vector<8x32xf32>
    %73 = vector.broadcast %5 : vector<1x32xf32> to vector<8x32xf32>
    %74 = arith.mulf %72, %73 : vector<8x32xf32>
    %cst_26 = arith.constant dense<0.000000e+00> : vector<8xf32>
    %75 = vector.multi_reduction <add>, %74, %cst_26 [1] : vector<8x32xf32> to vector<8xf32>
    %76 = vector.shape_cast %75 : vector<8xf32> to vector<8x1xf32>
    %77 = vector.broadcast %8 : f32 to vector<8x1xf32>
    %78 = arith.addf %76, %77 : vector<8x1xf32>
    %79 = vector.shape_cast %78 : vector<8x1xf32> to vector<8x1xf32>
    %80 = vector.broadcast %79 : vector<8x1xf32> to vector<8x128xf32>
    %c0_27 = arith.constant 0 : index
    %c0_28 = arith.constant 0 : index
    %81 = vector.load %arg6[%c0_27, %c0_28] : memref<8x128xf32, #tpu.memory_space<vmem>>, vector<8x128xf32>
    tpu.vector_store %arg6[%c0_27, %c0_28], %80 {strides = array<i32>} : memref<8x128xf32, #tpu.memory_space<vmem>>, vector<8x128xf32>,
    return
  }
  func.func @transform_0(%arg0: i32) -> (i32, i32, i32) {
    %c0_i32 = arith.constant 0 : i32
    %c0_i32_0 = arith.constant 0 : i32
    %c0_i32_1 = arith.constant 0 : i32
    return %arg0, %c0_i32, %c0_i32_0 : i32, i32, i32
  }
  func.func @transform_1(%arg0: i32) -> (i32, i32) {
    %c0_i32 = arith.constant 0 : i32
    %c0_i32_0 = arith.constant 0 : i32
    return %arg0, %c0_i32 : i32, i32
  }
  func.func @transform_2(%arg0: i32) -> (i32, i32) {
    %c0_i32 = arith.constant 0 : i32
    %c0_i32_0 = arith.constant 0 : i32
    %c0_i32_1 = arith.constant 0 : i32
    return %c0_i32, %c0_i32_0 : i32, i32
  }
  func.func @transform_3(%arg0: i32) -> (i32, i32) {
    %c0_i32 = arith.constant 0 : i32
    %c0_i32_0 = arith.constant 0 : i32
    %c0_i32_1 = arith.constant 0 : i32
    return %c0_i32, %c0_i32_0 : i32, i32
  }
  func.func @transform_4(%arg0: i32) -> i32 {
    %c0_i32 = arith.constant 0 : i32
    %c0_i32_0 = arith.constant 0 : i32
    return %c0_i32 : i32
  }
  func.func @transform_5(%arg0: i32) -> (i32, i32) {
    %c0_i32 = arith.constant 0 : i32
    %c0_i32_0 = arith.constant 0 : i32
    return %arg0, %c0_i32 : i32, i32
  }
}

</mosaic_0001>

<llo_original>
// kernel: tpu_custom_call.1
$region0: #{tpu_custom_call.1}
  #allocation0 [shape = 'u32[]', space=smem, size = 0x4, offset = 0x4, fixed_abs, tag = 'smem constant byte address 0x4 - core index']
  #allocation1 [shape = 'u32[72,128]{1,0:T(1,128)}', space=vmem, size = 0x9000, scoped, tag = 'internal scratch']
  %s0 = inlined_call_operand.hbm [shape: f32[8,8,32], index: 0, kind: input, shape index: {}]
  %s1 = inlined_call_operand.hbm [shape: f32[8,8], index: 1, kind: input, shape index: {}]
  %s2 = inlined_call_operand.hbm [shape: f32[8,32], index: 2, kind: input, shape index: {}]
  %s3 = inlined_call_operand.hbm [shape: f32[32,32], index: 3, kind: input, shape index: {}]
  %s4 = inlined_call_operand.vmem [shape: f32[3], index: 4, kind: input, shape index: {}]
  %s5 = inlined_call_operand.hbm [shape: f32[8,128], index: 5, kind: output, shape index: {}]
  %s6 = sld [smem:[#allocation0]]
  $region50: #{tpu_custom_call.1} parent=0
    _
  %s8 = ssub.s32 1, %s6
  %s9 = scalar_select 0, %s8, %s6
  $region1: #{tpu_custom_call.1} parent=0
    #allocation2 [shape = 'u8[32768]{0}', space=vmem, size = 0x8000, scoped, tag = 'input window, operand 0, single buffered']
    #allocation3 [shape = 's32[1]{0}', space=sflag, size = 0x4, scoped, tag = 'scoped memory for tpu_custom_call.1']
    #allocation4 [shape = 's32[1]{0}', space=sflag, size = 0x4, scoped, tag = 'scoped memory for tpu_custom_call.1']
    #allocation5 [shape = 's32[1]{0}', space=sflag, size = 0x4, scoped, tag = 'scoped memory for tpu_custom_call.1']
    #allocation6 [shape = 'u8[4096]{0}', space=vmem, size = 0x1000, scoped, tag = 'input window, operand 1, single buffered']
    #allocation7 [shape = 's32[1]{0}', space=sflag, size = 0x4, scoped, tag = 'scoped memory for tpu_custom_call.1']
    #allocation8 [shape = 'u8[4096]{0}', space=vmem, size = 0x1000, scoped, tag = 'input window, operand 2, single buffered']
    #allocation9 [shape = 'u8[16384]{0}', space=vmem, size = 0x4000, scoped, tag = 'input window, operand 3, single buffered']
    #allocation10 [shape = 's32[1]{0}', space=sflag, size = 0x4, scoped, tag = 'scoped memory for tpu_custom_call.1']
    #allocation11 [shape = 'u8[512]{0}', space=smem, size = 0x200, scoped, tag = 'input window, operand 4, single buffered']
    #allocation12 [shape = 'u8[4096]{0}', space=vmem, size = 0x1000, scoped, tag = 'output window, operand 0, single buffered']
    %10 = vsyncpa [#allocation3], 0
    %11 = vsyncpa [#allocation7], 0
    %12 = vsyncpa [#allocation10], 0
    %13 = vsyncpa [#allocation5], 0
    %14 = vsyncpa [#allocation4], 0
    // Predicated region
    $region2: #{tpu_custom_call.1} parent=1 // pred_check
      _
    $region3: #{tpu_custom_call.1} parent=1 // pred_check_branch
      %16 = sbr.rel (0) target = $region5
    $region4: #{tpu_custom_call.1} parent=1 // pred_region
      %18 = vsyncadd [#allocation3], 0
      %s19 = sshll.u32 %s0, 4
      %s20 = int_to_ptr.hbm [resolvable:$true] %s19
      %s21 = sshll.u32 [#allocation2], 4
      %s22 = int_to_ptr.vmem [resolvable:$true] %s21
      %27 = dma.hbm_to_vmem [thread:$0]  %s20, 1024, %s22, [#allocation3], 128, 128, 8
    $region5: #{tpu_custom_call.1} parent=1 // pred_fallthru
      _
    // Predicated region
    $region6: #{tpu_custom_call.1} parent=1 // pred_check
      _
    $region7: #{tpu_custom_call.1} parent=1 // pred_check_branch
      %29 = sbr.rel (0) target = $region9
    $region8: #{tpu_custom_call.1} parent=1 // pred_region
      %31 = vsyncadd [#allocation7], 0
      %s33 = sshll.u32 %s1, 4
      %s34 = int_to_ptr.hbm [resolvable:$true] %s33
      %s35 = sshll.u32 [#allocation6], 4
      %s36 = int_to_ptr.vmem [resolvable:$true] %s35
      %38 = dma.hbm_to_vmem [thread:$0]  %s34, 128, %s36, [#allocation7]
    $region9: #{tpu_custom_call.1} parent=1 // pred_fallthru
      _
    // Predicated region
    $region10: #{tpu_custom_call.1} parent=1 // pred_check
      _
    $region11: #{tpu_custom_call.1} parent=1 // pred_check_branch
      %40 = sbr.rel (0) target = $region13
    $region12: #{tpu_custom_call.1} parent=1 // pred_region
      %42 = vsyncadd [#allocation7], 0
      %s44 = sshll.u32 %s2, 4
      %s45 = int_to_ptr.hbm [resolvable:$true] %s44
      %s46 = sshll.u32 [#allocation8], 4
      %s47 = int_to_ptr.vmem [resolvable:$true] %s46
      %49 = dma.hbm_to_vmem [thread:$0]  %s45, 128, %s47, [#allocation7]
    $region13: #{tpu_custom_call.1} parent=1 // pred_fallthru
      _
    // Predicated region
    $region14: #{tpu_custom_call.1} parent=1 // pred_check
      _
    $region15: #{tpu_custom_call.1} parent=1 // pred_check_branch
      %51 = sbr.rel (0) target = $region17
    $region16: #{tpu_custom_call.1} parent=1 // pred_region
      %53 = vsyncadd [#allocation10], 0
      %s54 = sshll.u32 %s3, 4
      %s55 = int_to_ptr.hbm [resolvable:$true] %s54
      %s56 = sshll.u32 [#allocation9], 4
      %s57 = int_to_ptr.vmem [resolvable:$true] %s56
      %62 = dma.hbm_to_vmem [thread:$0]  %s55, 512, %s57, [#allocation10], 128, 128, 8
    $region17: #{tpu_custom_call.1} parent=1 // pred_fallthru
      _
    // Predicated region
    $region18: #{tpu_custom_call.1} parent=1 // pred_check
      _
    $region19: #{tpu_custom_call.1} parent=1 // pred_check_branch
      %64 = sbr.rel (0) target = $region21
    $region20: #{tpu_custom_call.1} parent=1 // pred_region
      %66 = vsyncadd [#allocation5], 0
      %s68 = sshll.u32 %s4, 4
      %s69 = int_to_ptr.vmem [resolvable:$true] %s68
      %71 = dma.vmem_to_smem %s69, 16, [#allocation11], [#allocation5]
    $region21: #{tpu_custom_call.1} parent=1 // pred_fallthru
      _
    // Predicated region
    $region22: #{tpu_custom_call.1} parent=1 // pred_check
      _
    $region23: #{tpu_custom_call.1} parent=1 // pred_check_branch
      %73 = sbr.rel (0) target = $region25
    $region24: #{tpu_custom_call.1} parent=1 // pred_region
      %75 = dma.done [#allocation3], 1024
    $region25: #{tpu_custom_call.1} parent=1 // pred_fallthru
      _
    // Predicated region
    $region26: #{tpu_custom_call.1} parent=1 // pred_check
      _
    $region27: #{tpu_custom_call.1} parent=1 // pred_check_branch
      %77 = sbr.rel (0) target = $region29
    $region28: #{tpu_custom_call.1} parent=1 // pred_region
      %79 = dma.done [#allocation7], 128
    $region29: #{tpu_custom_call.1} parent=1 // pred_fallthru
      _
    // Predicated region
    $region30: #{tpu_custom_call.1} parent=1 // pred_check
      _
    $region31: #{tpu_custom_call.1} parent=1 // pred_check_branch
      %81 = sbr.rel (0) target = $region33
    $region32: #{tpu_custom_call.1} parent=1 // pred_region
      %83 = dma.done [#allocation7], 128
    $region33: #{tpu_custom_call.1} parent=1 // pred_fallthru
      _
    // Predicated region
    $region34: #{tpu_custom_call.1} parent=1 // pred_check
      _
    $region35: #{tpu_custom_call.1} parent=1 // pred_check_branch
      %85 = sbr.rel (0) target = $region37
    $region36: #{tpu_custom_call.1} parent=1 // pred_region
      %87 = dma.done [#allocation10], 512
    $region37: #{tpu_custom_call.1} parent=1 // pred_fallthru
      _
    // Predicated region
    $region38: #{tpu_custom_call.1} parent=1 // pred_check
      _
    $region39: #{tpu_custom_call.1} parent=1 // pred_check_branch
      %89 = sbr.rel (0) target = $region41
    $region40: #{tpu_custom_call.1} parent=1 // pred_region
      %91 = dma.done [#allocation5], 16
    $region41: #{tpu_custom_call.1} parent=1 // pred_fallthru
      _
    %92 = sfence
    %v93 = vld [vmem:[#allocation2] sm:$0xff]
    %v94 = vld [vmem:[#allocation2 + $0x8] sm:$0xff]
    %v95 = vld [vmem:[#allocation2 + $0x10] sm:$0xff]
    %v96 = vld [vmem:[#allocation2 + $0x18] sm:$0xff]
    %v97 = vld [vmem:[#allocation2 + $0x20] sm:$0xff]
    %v98 = vld [vmem:[#allocation2 + $0x28] sm:$0xff]
    %v99 = vld [vmem:[#allocation2 + $0x30] sm:$0xff]
    %v100 = vld [vmem:[#allocation2 + $0x38] sm:$0xff]
    %v101 = vld [vmem:[#allocation6] sm:$0xff]
    %v102 = vld [vmem:[#allocation8] sm:$0xff]
    %s103 = sld [smem:[#allocation11]]
    %s104 = sld [smem:[#allocation11 + $0x1]]
    %s105 = sld [smem:[#allocation11 + $0x2]]
    %vm106 = vcmask 261120
    %v107 = vsel %vm106, %v93, 0.0
    %108 = vadd.xlane.f32.xlu0 %v107
    %v109 = vpop.xlane.xlu0 %108
    %v110 = vsel %vm106, %v94, 0.0
    %111 = vadd.xlane.f32.xlu0 %v110
    %v112 = vpop.xlane.xlu0 %111
    %v113 = vsel %vm106, %v95, 0.0
    %114 = vadd.xlane.f32.xlu0 %v113
    %v115 = vpop.xlane.xlu0 %114
    %v116 = vsel %vm106, %v96, 0.0
    %117 = vadd.xlane.f32.xlu0 %v116
    %v118 = vpop.xlane.xlu0 %117
    %v119 = vsel %vm106, %v97, 0.0
    %120 = vadd.xlane.f32.xlu0 %v119
    %v121 = vpop.xlane.xlu0 %120
    %v122 = vsel %vm106, %v98, 0.0
    %123 = vadd.xlane.f32.xlu0 %v122
    %v124 = vpop.xlane.xlu0 %123
    %v125 = vsel %vm106, %v99, 0.0
    %126 = vadd.xlane.f32.xlu0 %v125
    %v127 = vpop.xlane.xlu0 %126
    %v128 = vsel %vm106, %v100, 0.0
    %129 = vadd.xlane.f32.xlu0 %v128
    %v130 = vpop.xlane.xlu0 %129
    %v131 = vmul.f32 %v93, %v93
    %v132 = vmul.f32 %v94, %v94
    %v133 = vmul.f32 %v95, %v95
    %v134 = vmul.f32 %v96, %v96
    %v135 = vmul.f32 %v97, %v97
    %v136 = vmul.f32 %v98, %v98
    %v137 = vmul.f32 %v99, %v99
    %v138 = vmul.f32 %v100, %v100
    %v139 = vsel %vm106, %v131, 0.0
    %140 = vadd.xlane.f32.xlu0 %v139
    %v141 = vpop.xlane.xlu0 %140
    %v142 = vsel %vm106, %v132, 0.0
    %143 = vadd.xlane.f32.xlu0 %v142
    %v144 = vpop.xlane.xlu0 %143
    %v145 = vsel %vm106, %v133, 0.0
    %146 = vadd.xlane.f32.xlu0 %v145
    %v147 = vpop.xlane.xlu0 %146
    %v148 = vsel %vm106, %v134, 0.0
    %149 = vadd.xlane.f32.xlu0 %v148
    %v150 = vpop.xlane.xlu0 %149
    %v151 = vsel %vm106, %v135, 0.0
    %152 = vadd.xlane.f32.xlu0 %v151
    %v153 = vpop.xlane.xlu0 %152
    %v154 = vsel %vm106, %v136, 0.0
    %155 = vadd.xlane.f32.xlu0 %v154
    %v156 = vpop.xlane.xlu0 %155
    %v157 = vsel %vm106, %v137, 0.0
    %158 = vadd.xlane.f32.xlu0 %v157
    %v159 = vpop.xlane.xlu0 %158
    %v160 = vsel %vm106, %v138, 0.0
    %161 = vadd.xlane.f32.xlu0 %v160
    %v162 = vpop.xlane.xlu0 %161
    %v163 = vperm.slane %v102, 0
    %v164 = vmul.f32 %v93, %v163
    %v165 = vmul.f32 %v94, %v163
    %v166 = vmul.f32 %v95, %v163
    %v167 = vmul.f32 %v96, %v163
    %v168 = vmul.f32 %v97, %v163
    %v169 = vmul.f32 %v98, %v163
    %v170 = vmul.f32 %v99, %v163
    %v171 = vmul.f32 %v100, %v163
    %v172 = vsel %vm106, %v164, 0.0
    %173 = vadd.xlane.f32.xlu0 %v172
    %v174 = vpop.xlane.xlu0 %173
    %v175 = vsel %vm106, %v165, 0.0
    %176 = vadd.xlane.f32.xlu0 %v175
    %v177 = vpop.xlane.xlu0 %176
    %v178 = vsel %vm106, %v166, 0.0
    %179 = vadd.xlane.f32.xlu0 %v178
    %v180 = vpop.xlane.xlu0 %179
    %v181 = vsel %vm106, %v167, 0.0
    %182 = vadd.xlane.f32.xlu0 %v181
    %v183 = vpop.xlane.xlu0 %182
    %v184 = vsel %vm106, %v168, 0.0
    %185 = vadd.xlane.f32.xlu0 %v184
    %v186 = vpop.xlane.xlu0 %185
    %v187 = vsel %vm106, %v169, 0.0
    %188 = vadd.xlane.f32.xlu0 %v187
    %v189 = vpop.xlane.xlu0 %188
    %v190 = vsel %vm106, %v170, 0.0
    %191 = vadd.xlane.f32.xlu0 %v190
    %v192 = vpop.xlane.xlu0 %191
    %v193 = vsel %vm106, %v171, 0.0
    %194 = vadd.xlane.f32.xlu0 %v193
    %v195 = vpop.xlane.xlu0 %194
    %v196 = vmul.f32 %v109, 0.03125
    %v197 = vmul.f32 %v112, 0.03125
    %v198 = vmul.f32 %v115, 0.03125
    %v199 = vmul.f32 %v118, 0.03125
    %v200 = vmul.f32 %v121, 0.03125
    %v201 = vmul.f32 %v124, 0.03125
    %v202 = vmul.f32 %v127, 0.03125
    %v203 = vmul.f32 %v130, 0.03125
    %v204 = vmul.f32 %v141, 0.03125
    %v205 = vmul.f32 %v144, 0.03125
    %v206 = vmul.f32 %v147, 0.03125
    %v207 = vmul.f32 %v150, 0.03125
    %v208 = vmul.f32 %v153, 0.03125
    %v209 = vmul.f32 %v156, 0.03125
    %v210 = vmul.f32 %v159, 0.03125
    %v211 = vmul.f32 %v162, 0.03125
    %v212 = vmul.f32 %v196, %v196
    %v213 = vmul.f32 %v197, %v197
    %v214 = vmul.f32 %v198, %v198
    %v215 = vmul.f32 %v199, %v199
    %v216 = vmul.f32 %v200, %v200
    %v217 = vmul.f32 %v201, %v201
    %v218 = vmul.f32 %v202, %v202
    %v219 = vmul.f32 %v203, %v203
    %v220 = vsub.f32 %v204, %v212
    %v221 = vsub.f32 %v205, %v213
    %v222 = vsub.f32 %v206, %v214
    %v223 = vsub.f32 %v207, %v215
    %v224 = vsub.f32 %v208, %v216
    %v225 = vsub.f32 %v209, %v217
    %v226 = vsub.f32 %v210, %v218
    %v227 = vsub.f32 %v211, %v219
    %v228 = vstv %s104
    %v229 = vmul.f32 %v196, %v228
    %v230 = vmul.f32 %v197, %v228
    %v231 = vmul.f32 %v198, %v228
    %v232 = vmul.f32 %v199, %v228
    %v233 = vmul.f32 %v200, %v228
    %v234 = vmul.f32 %v201, %v228
    %v235 = vmul.f32 %v202, %v228
    %v236 = vmul.f32 %v203, %v228
    %v237 = vsub.f32 %v174, %v229
    %v238 = vsub.f32 %v177, %v230
    %v239 = vsub.f32 %v180, %v231
    %v240 = vsub.f32 %v183, %v232
    %v241 = vsub.f32 %v186, %v233
    %v242 = vsub.f32 %v189, %v234
    %v243 = vsub.f32 %v192, %v235
    %v244 = vsub.f32 %v195, %v236
    %v245 = vadd.f32 %v220, 1e-05
    %v246 = vadd.f32 %v221, 1e-05
    %v247 = vadd.f32 %v222, 1e-05
    %v248 = vadd.f32 %v223, 1e-05
    %v249 = vadd.f32 %v224, 1e-05
    %v250 = vadd.f32 %v225, 1e-05
    %v251 = vadd.f32 %v226, 1e-05
    %v252 = vadd.f32 %v227, 1e-05
    %v253 = vrsqrt.pop %v245
    %v254 = vmul.f32 %v253, %v245
    %v255 = vmul.f32 %v254, %v253
    %v256 = vmul.f32 0.5, %v255
    %v257 = vsub.f32 1.5, %v256
    %v258 = vmul.f32 %v253, %v257
    %vm259 = vweird.f32 %v245
    %vm260 = vweird.f32 %v253
    %vm261 = vmor %vm259, %vm260
    %v262 = vsel %vm261, %v253, %v258
    %v263 = vrsqrt.pop %v246
    %v264 = vmul.f32 %v263, %v246
    %v265 = vmul.f32 %v264, %v263
    %v266 = vmul.f32 0.5, %v265
    %v267 = vsub.f32 1.5, %v266
    %v268 = vmul.f32 %v263, %v267
    %vm269 = vweird.f32 %v246
    %vm270 = vweird.f32 %v263
    %vm271 = vmor %vm269, %vm270
    %v272 = vsel %vm271, %v263, %v268
    %v273 = vrsqrt.pop %v247
    %v274 = vmul.f32 %v273, %v247
    %v275 = vmul.f32 %v274, %v273
    %v276 = vmul.f32 0.5, %v275
    %v277 = vsub.f32 1.5, %v276
    %v278 = vmul.f32 %v273, %v277
    %vm279 = vweird.f32 %v247
    %vm280 = vweird.f32 %v273
    %vm281 = vmor %vm279, %vm280
    %v282 = vsel %vm281, %v273, %v278
    %v283 = vrsqrt.pop %v248
    %v284 = vmul.f32 %v283, %v248
    %v285 = vmul.f32 %v284, %v283
    %v286 = vmul.f32 0.5, %v285
    %v287 = vsub.f32 1.5, %v286
    %v288 = vmul.f32 %v283, %v287
    %vm289 = vweird.f32 %v248
    %vm290 = vweird.f32 %v283
    %vm291 = vmor %vm289, %vm290
    %v292 = vsel %vm291, %v283, %v288
    %v293 = vrsqrt.pop %v249
    %v294 = vmul.f32 %v293, %v249
    %v295 = vmul.f32 %v294, %v293
    %v296 = vmul.f32 0.5, %v295
    %v297 = vsub.f32 1.5, %v296
    %v298 = vmul.f32 %v293, %v297
    %vm299 = vweird.f32 %v249
    %vm300 = vweird.f32 %v293
    %vm301 = vmor %vm299, %vm300
    %v302 = vsel %vm301, %v293, %v298
    %v303 = vrsqrt.pop %v250
    %v304 = vmul.f32 %v303, %v250
    %v305 = vmul.f32 %v304, %v303
    %v306 = vmul.f32 0.5, %v305
    %v307 = vsub.f32 1.5, %v306
    %v308 = vmul.f32 %v303, %v307
    %vm309 = vweird.f32 %v250
    %vm310 = vweird.f32 %v303
    %vm311 = vmor %vm309, %vm310
    %v312 = vsel %vm311, %v303, %v308
    %v313 = vrsqrt.pop %v251
    %v314 = vmul.f32 %v313, %v251
    %v315 = vmul.f32 %v314, %v313
    %v316 = vmul.f32 0.5, %v315
    %v317 = vsub.f32 1.5, %v316
    %v318 = vmul.f32 %v313, %v317
    %vm319 = vweird.f32 %v251
    %vm320 = vweird.f32 %v313
    %vm321 = vmor %vm319, %vm320
    %v322 = vsel %vm321, %v313, %v318
    %v323 = vrsqrt.pop %v252
    %v324 = vmul.f32 %v323, %v252
    %v325 = vmul.f32 %v324, %v323
    %v326 = vmul.f32 0.5, %v325
    %v327 = vsub.f32 1.5, %v326
    %v328 = vmul.f32 %v323, %v327
    %vm329 = vweird.f32 %v252
    %vm330 = vweird.f32 %v323
    %vm331 = vmor %vm329, %vm330
    %v332 = vsel %vm331, %v323, %v328
    %v333 = vmul.f32 %v237, %v262
    %v334 = vmul.f32 %v238, %v272
    %v335 = vmul.f32 %v239, %v282
    %v336 = vmul.f32 %v240, %v292
    %v337 = vmul.f32 %v241, %v302
    %v338 = vmul.f32 %v242, %v312
    %v339 = vmul.f32 %v243, %v322
    %v340 = vmul.f32 %v244, %v332
    %v341 = vstv %s103
    %v342 = vadd.f32 %v333, %v341
    %v343 = vadd.f32 %v334, %v341
    %v344 = vadd.f32 %v335, %v341
    %v345 = vadd.f32 %v336, %v341
    %v346 = vadd.f32 %v337, %v341
    %v347 = vadd.f32 %v338, %v341
    %v348 = vadd.f32 %v339, %v341
    %v349 = vadd.f32 %v340, %v341
    %vm350 = vcmp.eq.f32.partialorder %v101, 0.0
    %v359 = vlaneseq
    %v360 = vand.u32 %v359, 127
    %v361 = vperm.slane %v342, %v360
    %v362 = vperm.slane %v343, %v360
    %v363 = vperm.slane %v344, %v360
    %v364 = vperm.slane %v345, %v360
    %v365 = vperm.slane %v346, %v360
    %v366 = vperm.slane %v347, %v360
    %v367 = vperm.slane %v348, %v360
    %v368 = vperm.slane %v349, %v360
    %vm369 = vcmask 1041409
    %v370 = vsel %vm369, %v362, %v361
    %vm371 = vcmask 1042434
    %v372 = vsel %vm371, %v363, %v370
    %vm373 = vcmask 1043459
    %v374 = vsel %vm373, %v364, %v372
    %vm375 = vcmask 1044484
    %v376 = vsel %vm375, %v365, %v374
    %vm377 = vcmask 1045509
    %v378 = vsel %vm377, %v366, %v376
    %vm379 = vcmask 1046534
    %v380 = vsel %vm379, %v367, %v378
    %vm381 = vcmask 1047559
    %v382 = vsel %vm381, %v368, %v380
    %v384 = vsel %vm350, -1e+09, %v382
    %vm385 = vcmask 64512
    %v386 = vsel %vm385, %v384, -inf
    %387 = vmax.xlane.f32.xlu0 %v386
    %v388 = vpop.xlane.xlu0 %387
    %v389 = vsub.f32 %v384, %v388
    %v390 = vmul.f32 %v389, 1.442695
    %v391 = vpow.pop %v390
    %v392 = vsel %vm385, %v391, 0.0
    %393 = vadd.xlane.f32.xlu0 %v392
    %v394 = vpop.xlane.xlu0 %393
    %v395 = vrcp.pop %v394
    %v396 = vmul.f32 %v391, %v395
    %v397 = vperm.slane %v396, 0
    %v398 = vlaneseq
    %v399 = vshrl.u32 %v398, 7
    %401 = vset.pattern.permute.xlu0 %v399
    %402 = vperm.xlu0 %401, %v397
    %v403 = vpop.permute.xlu0 %402
    %v404 = vperm.slane %v396, 1
    %v405 = vlaneseq
    %v406 = vshrl.u32 %v405, 7
    %408 = vset.pattern.permute.xlu0 %v406
    %409 = vperm.xlu0 %408, %v404
    %v410 = vpop.permute.xlu0 %409
    %v411 = vperm.slane %v396, 2
    %v412 = vlaneseq
    %v413 = vshrl.u32 %v412, 7
    %415 = vset.pattern.permute.xlu0 %v413
    %416 = vperm.xlu0 %415, %v411
    %v417 = vpop.permute.xlu0 %416
    %v418 = vperm.slane %v396, 3
    %v419 = vlaneseq
    %v420 = vshrl.u32 %v419, 7
    %422 = vset.pattern.permute.xlu0 %v420
    %423 = vperm.xlu0 %422, %v418
    %v424 = vpop.permute.xlu0 %423
    %v425 = vperm.slane %v396, 4
    %v426 = vlaneseq
    %v427 = vshrl.u32 %v426, 7
    %429 = vset.pattern.permute.xlu0 %v427
    %430 = vperm.xlu0 %429, %v425
    %v431 = vpop.permute.xlu0 %430
    %v432 = vperm.slane %v396, 5
    %v433 = vlaneseq
    %v434 = vshrl.u32 %v433, 7
    %436 = vset.pattern.permute.xlu0 %v434
    %437 = vperm.xlu0 %436, %v432
    %v438 = vpop.permute.xlu0 %437
    %v439 = vperm.slane %v396, 6
    %v440 = vlaneseq
    %v441 = vshrl.u32 %v440, 7
    %443 = vset.pattern.permute.xlu0 %v441
    %444 = vperm.xlu0 %443, %v439
    %v445 = vpop.permute.xlu0 %444
    %v446 = vperm.slane %v396, 7
    %v447 = vlaneseq
    %v448 = vshrl.u32 %v447, 7
    %450 = vset.pattern.permute.xlu0 %v448
    %451 = vperm.xlu0 %450, %v446
    %v452 = vpop.permute.xlu0 %451
    %v453 = vmul.f32 %v403, %v93
    %v454 = vmul.f32 %v410, %v94
    %v455 = vmul.f32 %v417, %v95
    %v456 = vmul.f32 %v424, %v96
    %v457 = vmul.f32 %v431, %v97
    %v458 = vmul.f32 %v438, %v98
    %v459 = vmul.f32 %v445, %v99
    %v460 = vmul.f32 %v452, %v100
    %v461 = vsel %vm106, %v453, 0.0
    %v462 = vrot.slane %v461, 4
    %v463 = vadd.f32 %v461, %v462
    %v464 = vrot.slane %v463, 2
    %v465 = vadd.f32 %v463, %v464
    %v466 = vrot.slane %v465, 1
    %v467 = vadd.f32 %v465, %v466
    %v468 = vsel %vm106, %v454, 0.0
    %v469 = vrot.slane %v468, 4
    %v470 = vadd.f32 %v468, %v469
    %v471 = vrot.slane %v470, 2
    %v472 = vadd.f32 %v470, %v471
    %v473 = vrot.slane %v472, 1
    %v474 = vadd.f32 %v472, %v473
    %v475 = vsel %vm106, %v455, 0.0
    %v476 = vrot.slane %v475, 4
    %v477 = vadd.f32 %v475, %v476
    %v478 = vrot.slane %v477, 2
    %v479 = vadd.f32 %v477, %v478
    %v480 = vrot.slane %v479, 1
    %v481 = vadd.f32 %v479, %v480
    %v482 = vsel %vm106, %v456, 0.0
    %v483 = vrot.slane %v482, 4
    %v484 = vadd.f32 %v482, %v483
    %v485 = vrot.slane %v484, 2
    %v486 = vadd.f32 %v484, %v485
    %v487 = vrot.slane %v486, 1
    %v488 = vadd.f32 %v486, %v487
    %v489 = vsel %vm106, %v457, 0.0
    %v490 = vrot.slane %v489, 4
    %v491 = vadd.f32 %v489, %v490
    %v492 = vrot.slane %v491, 2
    %v493 = vadd.f32 %v491, %v492
    %v494 = vrot.slane %v493, 1
    %v495 = vadd.f32 %v493, %v494
    %v496 = vsel %vm106, %v458, 0.0
    %v497 = vrot.slane %v496, 4
    %v498 = vadd.f32 %v496, %v497
    %v499 = vrot.slane %v498, 2
    %v500 = vadd.f32 %v498, %v499
    %v501 = vrot.slane %v500, 1
    %v502 = vadd.f32 %v500, %v501
    %v503 = vsel %vm106, %v459, 0.0
    %v504 = vrot.slane %v503, 4
    %v505 = vadd.f32 %v503, %v504
    %v506 = vrot.slane %v505, 2
    %v507 = vadd.f32 %v505, %v506
    %v508 = vrot.slane %v507, 1
    %v509 = vadd.f32 %v507, %v508
    %v510 = vsel %vm106, %v460, 0.0
    %v511 = vrot.slane %v510, 4
    %v512 = vadd.f32 %v510, %v511
    %v513 = vrot.slane %v512, 2
    %v514 = vadd.f32 %v512, %v513
    %v515 = vrot.slane %v514, 1
    %v516 = vadd.f32 %v514, %v515
    %v525 = vsel %vm369, %v474, %v467
    %v526 = vsel %vm371, %v481, %v525
    %v527 = vsel %vm373, %v488, %v526
    %v528 = vsel %vm375, %v495, %v527
    %v529 = vsel %vm377, %v502, %v528
    %v530 = vsel %vm379, %v509, %v529
    %v531 = vsel %vm381, %v516, %v530
    %v533 = vsel %vm106, %v531, 0.0
    %534 = vadd.xlane.f32.xlu0 %v533
    %v535 = vpop.xlane.xlu0 %534
    %v536 = vrcp.pop 32.0
    %v537 = vmul.f32 32.0, %v536
    %v538 = vsub.f32 1.0, %v537
    %v539 = vmul.f32 %v536, %v538
    %v540 = vadd.f32 %v536, %v539
    %vm541 = vweird.f32 %v536
    %v542 = vsel %vm541, %v536, %v540
    %v543 = vmul.f32 %v535, %v542
    %v545 = vrot.slane %v543, 1
    %v546 = vrot.slane %v543, 2
    %v547 = vrot.slane %v543, 3
    %v548 = vrot.slane %v543, 4
    %v549 = vrot.slane %v543, 5
    %v550 = vrot.slane %v543, 6
    %v551 = vrot.slane %v543, 7
    %v560 = vsub.f32 %v467, %v543
    %v561 = vsub.f32 %v474, %v545
    %v562 = vsub.f32 %v481, %v546
    %v563 = vsub.f32 %v488, %v547
    %v564 = vsub.f32 %v495, %v548
    %v565 = vsub.f32 %v502, %v549
    %v566 = vsub.f32 %v509, %v550
    %v567 = vsub.f32 %v516, %v551
    %v568 = vmul.f32 %v560, %v560
    %v569 = vmul.f32 %v561, %v561
    %v570 = vmul.f32 %v562, %v562
    %v571 = vmul.f32 %v563, %v563
    %v572 = vmul.f32 %v564, %v564
    %v573 = vmul.f32 %v565, %v565
    %v574 = vmul.f32 %v566, %v566
    %v575 = vmul.f32 %v567, %v567
    %v584 = vrot.slane %v569, 7
    %v585 = vsel %vm369, %v584, %v568
    %v586 = vrot.slane %v570, 6
    %v587 = vsel %vm371, %v586, %v585
    %v588 = vrot.slane %v571, 5
    %v589 = vsel %vm373, %v588, %v587
    %v590 = vrot.slane %v572, 4
    %v591 = vsel %vm375, %v590, %v589
    %v592 = vrot.slane %v573, 3
    %v593 = vsel %vm377, %v592, %v591
    %v594 = vrot.slane %v574, 2
    %v595 = vsel %vm379, %v594, %v593
    %v596 = vrot.slane %v575, 1
    %v597 = vsel %vm381, %v596, %v595
    %v599 = vsel %vm106, %v597, 0.0
    %600 = vadd.xlane.f32.xlu0 %v599
    %v601 = vpop.xlane.xlu0 %600
    %v602 = vmul.f32 %v601, %v542
    %v603 = vadd.f32 %v602, 1e-05
    %v604 = vrsqrt.pop %v603
    %v605 = vmul.f32 %v604, %v603
    %v606 = vmul.f32 %v605, %v604
    %v607 = vmul.f32 0.5, %v606
    %v608 = vsub.f32 1.5, %v607
    %v609 = vmul.f32 %v604, %v608
    %vm610 = vweird.f32 %v603
    %vm611 = vweird.f32 %v604
    %vm612 = vmor %vm610, %vm611
    %v613 = vsel %vm612, %v604, %v609
    %v615 = vrot.slane %v613, 1
    %v616 = vrot.slane %v613, 2
    %v617 = vrot.slane %v613, 3
    %v618 = vrot.slane %v613, 4
    %v619 = vrot.slane %v613, 5
    %v620 = vrot.slane %v613, 6
    %v621 = vrot.slane %v613, 7
    %v630 = vmul.f32 %v560, %v613
    %v631 = vmul.f32 %v561, %v615
    %v632 = vmul.f32 %v562, %v616
    %v633 = vmul.f32 %v563, %v617
    %v634 = vmul.f32 %v564, %v618
    %v635 = vmul.f32 %v565, %v619
    %v636 = vmul.f32 %v566, %v620
    %v637 = vmul.f32 %v567, %v621
    %v638 = vld [vmem:[#allocation9] sm:$0xff]
    %v639 = vld [vmem:[#allocation9 + $0x8] sm:$0xff]
    %v640 = vld [vmem:[#allocation9 + $0x10] sm:$0xff]
    %v641 = vld [vmem:[#allocation9 + $0x18] sm:$0xff]
    %v642 = vperm.slane %v102, 1
    %v651 = vrot.slane %v631, 7
    %v652 = vsel %vm369, %v651, %v630
    %v653 = vrot.slane %v632, 6
    %v654 = vsel %vm371, %v653, %v652
    %v655 = vrot.slane %v633, 5
    %v656 = vsel %vm373, %v655, %v654
    %v657 = vrot.slane %v634, 4
    %v658 = vsel %vm375, %v657, %v656
    %v659 = vrot.slane %v635, 3
    %v660 = vsel %vm377, %v659, %v658
    %v661 = vrot.slane %v636, 2
    %v662 = vsel %vm379, %v661, %v660
    %v663 = vrot.slane %v637, 1
    %v664 = vsel %vm381, %v663, %v662
    %v665 = vsel %vm106, %v664, 0
    %667 = vmatpush.msra.mxu0 0.0
    %668 = vmatpush.msra.mxu0 0.0
    %669 = vmatpush.msra.mxu0 0.0
    %670 = vmatpush.msra.mxu0 0.0
    %671 = vmatpush.msra.mxu0 0.0
    %672 = vmatpush.msra.mxu0 0.0
    %673 = vmatpush.msra.mxu0 0.0
    %674 = vmatpush.msra.mxu0 0.0
    %675 = vmatpush.msra.mxu0 0.0
    %676 = vmatpush.msra.mxu0 0.0
    %677 = vmatpush.msra.mxu0 0.0
    %678 = vmatpush.msra.mxu0 0.0
    %679 = vmatpush.msra.mxu0 %v641
    %680 = vmatpush.msra.mxu0 %v640
    %681 = vmatpush.msra.mxu0 %v639
    %682 = vmatpush.msra.mxu0 %v638
    %683 = vmatmul.f32.gmra.mxu0 %v665
    %v684 = vpop.f32.mrf.mxu0
    %v685 = vadd.f32 %v642, %v684
    %686 = vdwg.mxu0
    %v687 = vmax.f32 %v685, 0.0
    %v688 = vperm.slane %v102, 2
    %v689 = vmul.f32 %v687, %v688
    %v690 = vsel %vm106, %v689, 0.0
    %691 = vadd.xlane.f32.xlu0 %v690
    %v692 = vpop.xlane.xlu0 %691
    %v693 = vstv %s105
    %v694 = vadd.f32 %v692, %v693
    %695 = vst [vmem:[#allocation12] sm:$0xff] %v694
    // Predicated region
    $region42: #{tpu_custom_call.1} parent=1 // pred_check
      _
    $region43: #{tpu_custom_call.1} parent=1 // pred_check_branch
      %697 = sbr.rel (0) target = $region45
    $region44: #{tpu_custom_call.1} parent=1 // pred_region
      %699 = vsyncadd [#allocation4], 0
      %s701 = sshll.u32 [#allocation12], 4
      %s702 = int_to_ptr.vmem [resolvable:$true] %s701
      %s703 = sshll.u32 %s5, 4
      %s704 = int_to_ptr.hbm [resolvable:$true] %s703
      %706 = dma.vmem_to_hbm [thread:$0]  %s702, 128, %s704, [#allocation4]
    $region45: #{tpu_custom_call.1} parent=1 // pred_fallthru
      _
    // Predicated region
    $region46: #{tpu_custom_call.1} parent=1 // pred_check
      _
    $region47: #{tpu_custom_call.1} parent=1 // pred_check_branch
      %708 = sbr.rel (0) target = $region49
    $region48: #{tpu_custom_call.1} parent=1 // pred_region
      %710 = dma.done [#allocation4], 128
    $region49: #{tpu_custom_call.1} parent=1 // pred_fallthru
      _
    %711 = vsyncpa [#allocation3], 1
    %712 = vsyncpa [#allocation7], 1
    %713 = vsyncpa [#allocation10], 1
    %714 = vsyncpa [#allocation4], 1
    %715 = vsyncpa [#allocation5], 1

</llo_original>
